<compile_context>
chip_gen: v5e
topology: v5e:2x2
jax: 0.10.0
libtpu: 0.0.40
codegen_flags: <defaults>
</compile_context>

<pallas_src>
import math
import functools

import jax
import jax.numpy as jnp
from jax import lax
from jax.experimental import pallas as pl
from jax.experimental.pallas import tpu as pltpu


# ----------------------------- Pallas kernel --------------------------------
def _mab_kernel(q_ref, k_ref, wq_ref, bq_ref, wkv_ref, bkv_ref,
                wo_ref, bo_ref, o_ref, *, num_heads, dim_V):
    f32 = jnp.float32
    bf16 = jnp.bfloat16

    TB, Nq, dim_Q = q_ref.shape
    _, Nk, dim_K = k_ref.shape
    dv = dim_V // num_heads

    # Flatten batch block into the matmul M dimension (leading-dim merge only).
    q = q_ref[...].reshape(TB * Nq, dim_Q)            # bf16 (cast in wrapper)
    k = k_ref[...].reshape(TB * Nk, dim_K)            # bf16

    # fc_q and fused (fc_k | fc_v): bf16 MXU inputs, f32 accumulation.
    # The K half of wkv/bkv already carries the 1/sqrt(dim_V) softmax scale.
    qp = jnp.dot(q, wq_ref[...], preferred_element_type=f32) + bq_ref[...]    # (TB*Nq, dim_V)
    kv = jnp.dot(k, wkv_ref[...], preferred_element_type=f32) + bkv_ref[...]  # (TB*Nk, 2*dim_V)

    # Back to per-batch layout (leading-dim split only); cast once for the MXU.
    qp3 = qp.reshape(TB, Nq, dim_V)                   # f32, used for the residual
    kv3 = kv.reshape(TB, Nk, 2 * dim_V)
    qb = qp3.astype(bf16)
    kb = kv3[..., :dim_V].astype(bf16)                # pre-scaled K projection
    vb = kv3[..., dim_V:].astype(bf16)

    heads = []
    for h in range(num_heads):                        # static unroll over heads
        sl = slice(h * dv, (h + 1) * dv)

        # batched over TB with a single leading batch dim (flash-style pattern)
        s = jnp.einsum('bqd,bkd->bqk', qb[..., sl], kb[..., sl],
                       preferred_element_type=f32)               # (TB, Nq, Nk)
        s = s - jnp.max(s, axis=-1, keepdims=True)                # stable softmax
        p = jnp.exp(s)
        a = p * pl.reciprocal(jnp.sum(p, axis=-1, keepdims=True), approx=True)

        av = jnp.einsum('bqk,bkd->bqd', a.astype(bf16), vb[..., sl],
                        preferred_element_type=f32)               # (TB, Nq, dv)
        heads.append(qp3[..., sl] + av)               # residual uses unscaled Q proj

    o3 = jnp.concatenate(heads, axis=-1)              # (TB, Nq, dim_V), head-major

    # O = O + relu(fc_o(O)) on the flattened slab (big M again).
    o2 = o3.reshape(TB * Nq, dim_V)
    oo = jnp.dot(o2.astype(bf16), wo_ref[...], preferred_element_type=f32) + bo_ref[...]
    out2 = o2 + jnp.maximum(oo, 0.0)

    o_ref[...] = out2.reshape(TB, Nq, dim_V).astype(o_ref.dtype)


# ------------------------------ JAX wrapper ----------------------------------
def mab_forward(Qx, Kx, params, *, num_heads):
    B, Nq, dim_Q = Qx.shape
    Bk, Nk, dim_K = Kx.shape
    assert B == Bk
    dim_V = params["wq"].shape[1]
    assert dim_V % num_heads == 0

    bf16 = jnp.bfloat16
    f32 = jnp.float32
    inv_scale = 1.0 / math.sqrt(dim_V)     # PyTorch MAB uses sqrt(dim_V), not sqrt(d_head)

    # Fold the softmax scale into the K projection (K only feeds the scores).
    wq = params["wq"].astype(bf16)                                             # (dim_Q, dim_V)
    wkv = jnp.concatenate([params["wk"] * inv_scale, params["wv"]],
                          axis=1).astype(bf16)                                 # (dim_K, 2*dim_V)
    wo = params["wo"].astype(bf16)                                             # (dim_V, dim_V)
    bq = params["bq"].reshape(1, dim_V).astype(f32)
    bkv = jnp.concatenate([params["bk"] * inv_scale,
                           params["bv"]]).reshape(1, 2 * dim_V).astype(f32)
    bo = params["bo"].reshape(1, dim_V).astype(f32)

    # Activations in bf16 (half the HBM->VMEM DMA bytes; MXU-native).
    Qb = Qx.astype(bf16)
    Kb = Kx.astype(bf16)

    # >= 2 grid steps when B >= 2 so both TCs get work on v7x; otherwise merge all.
    num_blocks = 2 if B >= 2 else 1
    TB = -(-B // num_blocks)
    Bp = TB * num_blocks
    if Bp != B:
        Qb = jnp.pad(Qb, ((0, Bp - B), (0, 0), (0, 0)))
        Kb = jnp.pad(Kb, ((0, Bp - B), (0, 0), (0, 0)))

    kernel = functools.partial(_mab_kernel, num_heads=num_heads, dim_V=dim_V)

    def full_spec(a):  # weights/biases: constant index_map -> stay VMEM-resident
        nd = a.ndim
        return pl.BlockSpec(a.shape, lambda b, _nd=nd: (0,) * _nd)

    weights = [wq, bq, wkv, bkv, wo, bo]
    in_specs = ([pl.BlockSpec((TB, Nq, dim_Q), lambda b: (b, 0, 0)),
                 pl.BlockSpec((TB, Nk, dim_K), lambda b: (b, 0, 0))]
                + [full_spec(a) for a in weights])

    out = pl.pallas_call(
        kernel,
        out_shape=jax.ShapeDtypeStruct((Bp, Nq, dim_V), jnp.float32),
        grid=(num_blocks,),
        in_specs=in_specs,
        out_specs=pl.BlockSpec((TB, Nq, dim_V), lambda b: (b, 0, 0)),
        compiler_params=pltpu.CompilerParams(
            dimension_semantics=("parallel",),
            vmem_limit_bytes=32 * 1024 * 1024),
    )(Qb, Kb, *weights)

    return out[:B]


# ---------------------------- parameter init ---------------------------------
def init_params(key, dim_Q, dim_K, dim_V):
    ks = jax.random.split(key, 8)

    def linear(kw, kb, fan_in, fan_out):
        bound = 1.0 / math.sqrt(fan_in)
        w = jax.random.uniform(kw, (fan_in, fan_out), jnp.float32, -bound, bound)
        b = jax.random.uniform(kb, (fan_out,), jnp.float32, -bound, bound)
        return w, b

    wq, bq = linear(ks[0], ks[1], dim_Q, dim_V)
    wk, bk = linear(ks[2], ks[3], dim_K, dim_V)
    wv, bv = linear(ks[4], ks[5], dim_K, dim_V)
    wo, bo = linear(ks[6], ks[7], dim_V, dim_V)
    return dict(wq=wq, bq=bq, wk=wk, bk=bk, wv=wv, bv=bv, wo=wo, bo=bo)


# --------------------------- pure-JAX reference -------------------------------
def reference_forward(Qx, Kx, params, *, num_heads):
    B = Qx.shape[0]
    dim_V = params["wq"].shape[1]
    dv = dim_V // num_heads
    hp = lax.Precision.HIGHEST

    Qp = jnp.einsum("bnd,dv->bnv", Qx, params["wq"], precision=hp) + params["bq"]
    Kp = jnp.einsum("bnd,dv->bnv", Kx, params["wk"], precision=hp) + params["bk"]
    Vp = jnp.einsum("bnd,dv->bnv", Kx, params["wv"], precision=hp) + params["bv"]

    # torch.cat(x.split(dv, 2), 0): head-major stacking along batch
    def split_heads(x):
        return jnp.concatenate([x[..., h * dv:(h + 1) * dv] for h in range(num_heads)], axis=0)

    Q_, K_, V_ = split_heads(Qp), split_heads(Kp), split_heads(Vp)
    A = jax.nn.softmax(
        jnp.einsum("bqd,bkd->bqk", Q_, K_, precision=hp) / math.sqrt(dim_V), axis=-1)
    O_ = Q_ + jnp.einsum("bqk,bkd->bqd", A, V_, precision=hp)
    # torch.cat(O_.split(B, 0), 2)
    O = jnp.concatenate([O_[h * B:(h + 1) * B] for h in range(num_heads)], axis=2)
    O = O + jax.nn.relu(jnp.einsum("bnv,vw->bnw", O, params["wo"], precision=hp) + params["bo"])
    return O


# ---------------------------------- main --------------------------------------
if __name__ == "__main__":
    B, Nq, Nk = 4, 8, 16
    dim_Q, dim_K, dim_V, num_heads = 24, 40, 32, 4

    key = jax.random.PRNGKey(0)
    kq, kk, kp = jax.random.split(key, 3)
    Qx = jax.random.normal(kq, (B, Nq, dim_Q), jnp.float32)
    Kx = jax.random.normal(kk, (B, Nk, dim_K), jnp.float32)
    params = init_params(kp, dim_Q, dim_K, dim_V)

    out = jax.block_until_ready(mab_forward(Qx, Kx, params, num_heads=num_heads))
    ref = jax.block_until_ready(reference_forward(Qx, Kx, params, num_heads=num_heads))

    assert out.shape == (B, Nq, dim_V)
    # bf16 MXU inputs + approx reciprocal vs. f32 HIGHEST reference -> loosened tolerance.
    if not jnp.allclose(out, ref, atol=4e-2, rtol=4e-2):
        raise AssertionError(
            f"mismatch: max abs diff = {float(jnp.max(jnp.abs(out - ref)))}")
    print("KERNEL_OK")
</pallas_src>

<mosaic_0001>
module attributes {stable_mosaic.version = 11 : i64} {
  func.func @_mab_kernel(%arg0: i32, %arg1: memref<2x8x24xbf16, #tpu.memory_space<vmem>>, %arg2: memref<2x16x40xbf16, #tpu.memory_space<vmem>>, %arg3: memref<24x32xbf16, #tpu.memory_space<vmem>>, %arg4: memref<1x32xf32, #tpu.memory_space<vmem>>, %arg5: memref<40x64xbf16, #tpu.memory_space<vmem>>, %arg6: memref<1x64xf32, #tpu.memory_space<vmem>>, %arg7: memref<32x32xbf16, #tpu.memory_space<vmem>>, %arg8: memref<1x32xf32, #tpu.memory_space<vmem>>, %arg9: memref<2x8x32xf32, #tpu.memory_space<vmem>>) attributes {dimension_semantics = [#tpu.dimension_semantics<parallel>], iteration_bounds = array<i64: 2>, scalar_prefetch = 0 : i64, scratch_operands = 0 : i64, tpu.core_type = #tpu.core_type<tc>, window_params = [{transform_indices = @transform_0, window_bounds = array<i64: 2, 8, 24>}, {transform_indices = @transform_1, window_bounds = array<i64: 2, 16, 40>}, {pipeline_mode = #tpu.pipeline_mode<synchronous>, transform_indices = @transform_2, window_bounds = array<i64: 24, 32>}, {pipeline_mode = #tpu.pipeline_mode<synchronous>, transform_indices = @transform_3, window_bounds = array<i64: 1, 32>}, {pipeline_mode = #tpu.pipeline_mode<synchronous>, transform_indices = @transform_4, window_bounds = array<i64: 40, 64>}, {pipeline_mode = #tpu.pipeline_mode<synchronous>, transform_indices = @transform_5, window_bounds = array<i64: 1, 64>}, {pipeline_mode = #tpu.pipeline_mode<synchronous>, transform_indices = @transform_6, window_bounds = array<i64: 32, 32>}, {pipeline_mode = #tpu.pipeline_mode<synchronous>, transform_indices = @transform_7, window_bounds = array<i64: 1, 32>}, {transform_indices = @transform_8, window_bounds = array<i64: 2, 8, 32>}]} {
    %c0 = arith.constant 0 : index
    %c0_0 = arith.constant 0 : index
    %c0_1 = arith.constant 0 : index
    %0 = vector.load %arg1[%c0, %c0_0, %c0_1] : memref<2x8x24xbf16, #tpu.memory_space<vmem>>, vector<2x8x24xbf16>
    %1 = vector.shape_cast %0 : vector<2x8x24xbf16> to vector<16x24xbf16>
    %c0_2 = arith.constant 0 : index
    %c0_3 = arith.constant 0 : index
    %c0_4 = arith.constant 0 : index
    %2 = vector.load %arg2[%c0_2, %c0_3, %c0_4] : memref<2x16x40xbf16, #tpu.memory_space<vmem>>, vector<2x16x40xbf16>
    %3 = vector.shape_cast %2 : vector<2x16x40xbf16> to vector<32x40xbf16>
    %c0_5 = arith.constant 0 : index
    %c0_6 = arith.constant 0 : index
    %4 = vector.load %arg3[%c0_5, %c0_6] : memref<24x32xbf16, #tpu.memory_space<vmem>>, vector<24x32xbf16>
    %cst = arith.constant dense<0.000000e+00> : vector<16x32xf32>
    %5 = tpu.matmul %1, %4, %cst {dimension_numbers = #tpu.dot_dimension_numbers<[1], [0], [0], [1], [0, 0, 1, 1], [], []>} : vector<16x24xbf16>, vector<24x32xbf16>, vector<16x32xf32> -> vector<16x32xf32>
    %c0_7 = arith.constant 0 : index
    %c0_8 = arith.constant 0 : index
    %6 = vector.load %arg4[%c0_7, %c0_8] : memref<1x32xf32, #tpu.memory_space<vmem>>, vector<1x32xf32>
    %7 = vector.broadcast %6 : vector<1x32xf32> to vector<16x32xf32>
    %8 = arith.addf %5, %7 : vector<16x32xf32>
    %c0_9 = arith.constant 0 : index
    %c0_10 = arith.constant 0 : index
    %9 = vector.load %arg5[%c0_9, %c0_10] : memref<40x64xbf16, #tpu.memory_space<vmem>>, vector<40x64xbf16>
    %cst_11 = arith.constant dense<0.000000e+00> : vector<32x64xf32>
    %10 = tpu.matmul %3, %9, %cst_11 {dimension_numbers = #tpu.dot_dimension_numbers<[1], [0], [0], [1], [0, 0, 1, 1], [], []>} : vector<32x40xbf16>, vector<40x64xbf16>, vector<32x64xf32> -> vector<32x64xf32>
    %c0_12 = arith.constant 0 : index
    %c0_13 = arith.constant 0 : index
    %11 = vector.load %arg6[%c0_12, %c0_13] : memref<1x64xf32, #tpu.memory_space<vmem>>, vector<1x64xf32>
    %12 = vector.broadcast %11 : vector<1x64xf32> to vector<32x64xf32>
    %13 = arith.addf %10, %12 : vector<32x64xf32>
    %14 = vector.shape_cast %8 : vector<16x32xf32> to vector<2x8x32xf32>
    %15 = vector.shape_cast %13 : vector<32x64xf32> to vector<2x16x64xf32>
    %16 = arith.truncf %14 : vector<2x8x32xf32> to vector<2x8x32xbf16>
    %17 = vector.extract_strided_slice %15 {offsets = [0, 0, 0], sizes = [2, 16, 32], strides = [1, 1, 1]} : vector<2x16x64xf32> to vector<2x16x32xf32>
    %18 = arith.truncf %17 : vector<2x16x32xf32> to vector<2x16x32xbf16>
    %19 = vector.extract_strided_slice %15 {offsets = [0, 0, 32], sizes = [2, 16, 32], strides = [1, 1, 1]} : vector<2x16x64xf32> to vector<2x16x32xf32>
    %20 = arith.truncf %19 : vector<2x16x32xf32> to vector<2x16x32xbf16>
    %21 = vector.extract_strided_slice %16 {offsets = [0, 0, 0], sizes = [2, 8, 8], strides = [1, 1, 1]} : vector<2x8x32xbf16> to vector<2x8x8xbf16>
    %22 = vector.extract_strided_slice %18 {offsets = [0, 0, 0], sizes = [2, 16, 8], strides = [1, 1, 1]} : vector<2x16x32xbf16> to vector<2x16x8xbf16>
    "tpu.trace_start"() <{level = 10 : i32, message = "bqd,bkd->bqk"}> : () -> ()
    %cst_14 = arith.constant dense<0.000000e+00> : vector<2x8x16xf32>
    %23 = tpu.matmul %21, %22, %cst_14 {dimension_numbers = #tpu.dot_dimension_numbers<[2], [2], [1], [1], [0, 0, 0, 1, 1, 1], [0], [0]>} : vector<2x8x8xbf16>, vector<2x16x8xbf16>, vector<2x8x16xf32> -> vector<2x8x16xf32>
    "tpu.trace_stop"() : () -> ()
    %cst_15 = arith.constant dense<0xFF800000> : vector<2x8xf32>
    %24 = vector.multi_reduction <maximumf>, %23, %cst_15 [2] : vector<2x8x16xf32> to vector<2x8xf32>
    %25 = vector.shape_cast %24 : vector<2x8xf32> to vector<2x8x1xf32>
    %26 = vector.broadcast %25 : vector<2x8x1xf32> to vector<2x8x16xf32>
    %27 = arith.subf %23, %26 : vector<2x8x16xf32>
    %28 = math.exp %27 : vector<2x8x16xf32>
    %cst_16 = arith.constant dense<0.000000e+00> : vector<2x8xf32>
    %29 = vector.multi_reduction <add>, %28, %cst_16 [2] : vector<2x8x16xf32> to vector<2x8xf32>
    %30 = vector.shape_cast %29 : vector<2x8xf32> to vector<2x8x1xf32>
    %31 = tpu.reciprocal %30 {approx = true} : vector<2x8x1xf32> -> vector<2x8x1xf32>
    %32 = vector.broadcast %31 : vector<2x8x1xf32> to vector<2x8x16xf32>
    %33 = arith.mulf %28, %32 : vector<2x8x16xf32>
    %34 = arith.truncf %33 : vector<2x8x16xf32> to vector<2x8x16xbf16>
    %35 = vector.extract_strided_slice %20 {offsets = [0, 0, 0], sizes = [2, 16, 8], strides = [1, 1, 1]} : vector<2x16x32xbf16> to vector<2x16x8xbf16>
    "tpu.trace_start"() <{level = 10 : i32, message = "bqk,bkd->bqd"}> : () -> ()
    %cst_17 = arith.constant dense<0.000000e+00> : vector<2x8x8xf32>
    %36 = tpu.matmul %34, %35, %cst_17 {dimension_numbers = #tpu.dot_dimension_numbers<[2], [1], [1], [2], [0, 0, 0, 1, 1, 2], [0], [0]>} : vector<2x8x16xbf16>, vector<2x16x8xbf16>, vector<2x8x8xf32> -> vector<2x8x8xf32>
    "tpu.trace_stop"() : () -> ()
    %37 = vector.extract_strided_slice %14 {offsets = [0, 0, 0], sizes = [2, 8, 8], strides = [1, 1, 1]} : vector<2x8x32xf32> to vector<2x8x8xf32>
    %38 = arith.addf %37, %36 : vector<2x8x8xf32>
    %39 = vector.extract_strided_slice %16 {offsets = [0, 0, 8], sizes = [2, 8, 8], strides = [1, 1, 1]} : vector<2x8x32xbf16> to vector<2x8x8xbf16>
    %40 = vector.extract_strided_slice %18 {offsets = [0, 0, 8], sizes = [2, 16, 8], strides = [1, 1, 1]} : vector<2x16x32xbf16> to vector<2x16x8xbf16>
    "tpu.trace_start"() <{level = 10 : i32, message = "bqd,bkd->bqk"}> : () -> ()
    %cst_18 = arith.constant dense<0.000000e+00> : vector<2x8x16xf32>
    %41 = tpu.matmul %39, %40, %cst_18 {dimension_numbers = #tpu.dot_dimension_numbers<[2], [2], [1], [1], [0, 0, 0, 1, 1, 1], [0], [0]>} : vector<2x8x8xbf16>, vector<2x16x8xbf16>, vector<2x8x16xf32> -> vector<2x8x16xf32>
    "tpu.trace_stop"() : () -> ()
    %cst_19 = arith.constant dense<0xFF800000> : vector<2x8xf32>
    %42 = vector.multi_reduction <maximumf>, %41, %cst_19 [2] : vector<2x8x16xf32> to vector<2x8xf32>
    %43 = vector.shape_cast %42 : vector<2x8xf32> to vector<2x8x1xf32>
    %44 = vector.broadcast %43 : vector<2x8x1xf32> to vector<2x8x16xf32>
    %45 = arith.subf %41, %44 : vector<2x8x16xf32>
    %46 = math.exp %45 : vector<2x8x16xf32>
    %cst_20 = arith.constant dense<0.000000e+00> : vector<2x8xf32>
    %47 = vector.multi_reduction <add>, %46, %cst_20 [2] : vector<2x8x16xf32> to vector<2x8xf32>
    %48 = vector.shape_cast %47 : vector<2x8xf32> to vector<2x8x1xf32>
    %49 = tpu.reciprocal %48 {approx = true} : vector<2x8x1xf32> -> vector<2x8x1xf32>
    %50 = vector.broadcast %49 : vector<2x8x1xf32> to vector<2x8x16xf32>
    %51 = arith.mulf %46, %50 : vector<2x8x16xf32>
    %52 = arith.truncf %51 : vector<2x8x16xf32> to vector<2x8x16xbf16>
    %53 = vector.extract_strided_slice %20 {offsets = [0, 0, 8], sizes = [2, 16, 8], strides = [1, 1, 1]} : vector<2x16x32xbf16> to vector<2x16x8xbf16>
    "tpu.trace_start"() <{level = 10 : i32, message = "bqk,bkd->bqd"}> : () -> ()
    %cst_21 = arith.constant dense<0.000000e+00> : vector<2x8x8xf32>
    %54 = tpu.matmul %52, %53, %cst_21 {dimension_numbers = #tpu.dot_dimension_numbers<[2], [1], [1], [2], [0, 0, 0, 1, 1, 2], [0], [0]>} : vector<2x8x16xbf16>, vector<2x16x8xbf16>, vector<2x8x8xf32> -> vector<2x8x8xf32>
    "tpu.trace_stop"() : () -> ()
    %55 = vector.extract_strided_slice %14 {offsets = [0, 0, 8], sizes = [2, 8, 8], strides = [1, 1, 1]} : vector<2x8x32xf32> to vector<2x8x8xf32>
    %56 = arith.addf %55, %54 : vector<2x8x8xf32>
    %57 = vector.extract_strided_slice %16 {offsets = [0, 0, 16], sizes = [2, 8, 8], strides = [1, 1, 1]} : vector<2x8x32xbf16> to vector<2x8x8xbf16>
    %58 = vector.extract_strided_slice %18 {offsets = [0, 0, 16], sizes = [2, 16, 8], strides = [1, 1, 1]} : vector<2x16x32xbf16> to vector<2x16x8xbf16>
    "tpu.trace_start"() <{level = 10 : i32, message = "bqd,bkd->bqk"}> : () -> ()
    %cst_22 = arith.constant dense<0.000000e+00> : vector<2x8x16xf32>
    %59 = tpu.matmul %57, %58, %cst_22 {dimension_numbers = #tpu.dot_dimension_numbers<[2], [2], [1], [1], [0, 0, 0, 1, 1, 1], [0], [0]>} : vector<2x8x8xbf16>, vector<2x16x8xbf16>, vector<2x8x16xf32> -> vector<2x8x16xf32>
    "tpu.trace_stop"() : () -> ()
    %cst_23 = arith.constant dense<0xFF800000> : vector<2x8xf32>
    %60 = vector.multi_reduction <maximumf>, %59, %cst_23 [2] : vector<2x8x16xf32> to vector<2x8xf32>
    %61 = vector.shape_cast %60 : vector<2x8xf32> to vector<2x8x1xf32>
    %62 = vector.broadcast %61 : vector<2x8x1xf32> to vector<2x8x16xf32>
    %63 = arith.subf %59, %62 : vector<2x8x16xf32>
    %64 = math.exp %63 : vector<2x8x16xf32>
    %cst_24 = arith.constant dense<0.000000e+00> : vector<2x8xf32>
    %65 = vector.multi_reduction <add>, %64, %cst_24 [2] : vector<2x8x16xf32> to vector<2x8xf32>
    %66 = vector.shape_cast %65 : vector<2x8xf32> to vector<2x8x1xf32>
    %67 = tpu.reciprocal %66 {approx = true} : vector<2x8x1xf32> -> vector<2x8x1xf32>
    %68 = vector.broadcast %67 : vector<2x8x1xf32> to vector<2x8x16xf32>
    %69 = arith.mulf %64, %68 : vector<2x8x16xf32>
    %70 = arith.truncf %69 : vector<2x8x16xf32> to vector<2x8x16xbf16>
    %71 = vector.extract_strided_slice %20 {offsets = [0, 0, 16], sizes = [2, 16, 8], strides = [1, 1, 1]} : vector<2x16x32xbf16> to vector<2x16x8xbf16>
    "tpu.trace_start"() <{level = 10 : i32, message = "bqk,bkd->bqd"}> : () -> ()
    %cst_25 = arith.constant dense<0.000000e+00> : vector<2x8x8xf32>
    %72 = tpu.matmul %70, %71, %cst_25 {dimension_numbers = #tpu.dot_dimension_numbers<[2], [1], [1], [2], [0, 0, 0, 1, 1, 2], [0], [0]>} : vector<2x8x16xbf16>, vector<2x16x8xbf16>, vector<2x8x8xf32> -> vector<2x8x8xf32>
    "tpu.trace_stop"() : () -> ()
    %73 = vector.extract_strided_slice %14 {offsets = [0, 0, 16], sizes = [2, 8, 8], strides = [1, 1, 1]} : vector<2x8x32xf32> to vector<2x8x8xf32>
    %74 = arith.addf %73, %72 : vector<2x8x8xf32>
    %75 = vector.extract_strided_slice %16 {offsets = [0, 0, 24], sizes = [2, 8, 8], strides = [1, 1, 1]} : vector<2x8x32xbf16> to vector<2x8x8xbf16>
    %76 = vector.extract_strided_slice %18 {offsets = [0, 0, 24], sizes = [2, 16, 8], strides = [1, 1, 1]} : vector<2x16x32xbf16> to vector<2x16x8xbf16>
    "tpu.trace_start"() <{level = 10 : i32, message = "bqd,bkd->bqk"}> : () -> ()
    %cst_26 = arith.constant dense<0.000000e+00> : vector<2x8x16xf32>
    %77 = tpu.matmul %75, %76, %cst_26 {dimension_numbers = #tpu.dot_dimension_numbers<[2], [2], [1], [1], [0, 0, 0, 1, 1, 1], [0], [0]>} : vector<2x8x8xbf16>, vector<2x16x8xbf16>, vector<2x8x16xf32> -> vector<2x8x16xf32>
    "tpu.trace_stop"() : () -> ()
    %cst_27 = arith.constant dense<0xFF800000> : vector<2x8xf32>
    %78 = vector.multi_reduction <maximumf>, %77, %cst_27 [2] : vector<2x8x16xf32> to vector<2x8xf32>
    %79 = vector.shape_cast %78 : vector<2x8xf32> to vector<2x8x1xf32>
    %80 = vector.broadcast %79 : vector<2x8x1xf32> to vector<2x8x16xf32>
    %81 = arith.subf %77, %80 : vector<2x8x16xf32>
    %82 = math.exp %81 : vector<2x8x16xf32>
    %cst_28 = arith.constant dense<0.000000e+00> : vector<2x8xf32>
    %83 = vector.multi_reduction <add>, %82, %cst_28 [2] : vector<2x8x16xf32> to vector<2x8xf32>
    %84 = vector.shape_cast %83 : vector<2x8xf32> to vector<2x8x1xf32>
    %85 = tpu.reciprocal %84 {approx = true} : vector<2x8x1xf32> -> vector<2x8x1xf32>
    %86 = vector.broadcast %85 : vector<2x8x1xf32> to vector<2x8x16xf32>
    %87 = arith.mulf %82, %86 : vector<2x8x16xf32>
    %88 = arith.truncf %87 : vector<2x8x16xf32> to vector<2x8x16xbf16>
    %89 = vector.extract_strided_slice %20 {offsets = [0, 0, 24], sizes = [2, 16, 8], strides = [1, 1, 1]} : vector<2x16x32xbf16> to vector<2x16x8xbf16>
    "tpu.trace_start"() <{level = 10 : i32, message = "bqk,bkd->bqd"}> : () -> ()
    %cst_29 = arith.constant dense<0.000000e+00> : vector<2x8x8xf32>
    %90 = tpu.matmul %88, %89, %cst_29 {dimension_numbers = #tpu.dot_dimension_numbers<[2], [1], [1], [2], [0, 0, 0, 1, 1, 2], [0], [0]>} : vector<2x8x16xbf16>, vector<2x16x8xbf16>, vector<2x8x8xf32> -> vector<2x8x8xf32>
    "tpu.trace_stop"() : () -> ()
    %91 = vector.extract_strided_slice %14 {offsets = [0, 0, 24], sizes = [2, 8, 8], strides = [1, 1, 1]} : vector<2x8x32xf32> to vector<2x8x8xf32>
    %92 = arith.addf %91, %90 : vector<2x8x8xf32>
    %93 = tpu.concatenate %38, %56, %74, %92 in 2 : vector<2x8x8xf32>, vector<2x8x8xf32>, vector<2x8x8xf32>, vector<2x8x8xf32> -> vector<2x8x32xf32>
    %94 = vector.shape_cast %93 : vector<2x8x32xf32> to vector<16x32xf32>
    %95 = arith.truncf %94 : vector<16x32xf32> to vector<16x32xbf16>
    %c0_30 = arith.constant 0 : index
    %c0_31 = arith.constant 0 : index
    %96 = vector.load %arg7[%c0_30, %c0_31] : memref<32x32xbf16, #tpu.memory_space<vmem>>, vector<32x32xbf16>
    %cst_32 = arith.constant dense<0.000000e+00> : vector<16x32xf32>
    %97 = tpu.matmul %95, %96, %cst_32 {dimension_numbers = #tpu.dot_dimension_numbers<[1], [0], [0], [1], [0, 0, 1, 1], [], []>} : vector<16x32xbf16>, vector<32x32xbf16>, vector<16x32xf32> -> vector<16x32xf32>
    %c0_33 = arith.constant 0 : index
    %c0_34 = arith.constant 0 : index
    %98 = vector.load %arg8[%c0_33, %c0_34] : memref<1x32xf32, #tpu.memory_space<vmem>>, vector<1x32xf32>
    %99 = vector.broadcast %98 : vector<1x32xf32> to vector<16x32xf32>
    %100 = arith.addf %97, %99 : vector<16x32xf32>
    %cst_35 = arith.constant 0.000000e+00 : f32
    %101 = vector.broadcast %cst_35 : f32 to vector<16x32xf32>
    %102 = arith.maximumf %100, %101 : vector<16x32xf32>
    %103 = arith.addf %94, %102 : vector<16x32xf32>
    %104 = vector.shape_cast %103 : vector<16x32xf32> to vector<2x8x32xf32>
    %c0_36 = arith.constant 0 : index
    %c0_37 = arith.constant 0 : index
    %c0_38 = arith.constant 0 : index
    %105 = vector.load %arg9[%c0_36, %c0_37, %c0_38] : memref<2x8x32xf32, #tpu.memory_space<vmem>>, vector<2x8x32xf32>
    tpu.vector_store %arg9[%c0_36, %c0_37, %c0_38], %104 {strides = array<i32>} : memref<2x8x32xf32, #tpu.memory_space<vmem>>, vector<2x8x32xf32>,
    return
  }
  func.func @transform_0(%arg0: i32) -> (i32, i32, i32) {
    %c0_i32 = arith.constant 0 : i32
    %c0_i32_0 = arith.constant 0 : i32
    %c0_i32_1 = arith.constant 0 : i32
    return %arg0, %c0_i32, %c0_i32_0 : i32, i32, i32
  }
  func.func @transform_1(%arg0: i32) -> (i32, i32, i32) {
    %c0_i32 = arith.constant 0 : i32
    %c0_i32_0 = arith.constant 0 : i32
    %c0_i32_1 = arith.constant 0 : i32
    return %arg0, %c0_i32, %c0_i32_0 : i32, i32, i32
  }
  func.func @transform_2(%arg0: i32) -> (i32, i32) {
    %c0_i32 = arith.constant 0 : i32
    %c0_i32_0 = arith.constant 0 : i32
    %c0_i32_1 = arith.constant 0 : i32
    return %c0_i32, %c0_i32_0 : i32, i32
  }
  func.func @transform_3(%arg0: i32) -> (i32, i32) {
    %c0_i32 = arith.constant 0 : i32
    %c0_i32_0 = arith.constant 0 : i32
    %c0_i32_1 = arith.constant 0 : i32
    return %c0_i32, %c0_i32_0 : i32, i32
  }
  func.func @transform_4(%arg0: i32) -> (i32, i32) {
    %c0_i32 = arith.constant 0 : i32
    %c0_i32_0 = arith.constant 0 : i32
    %c0_i32_1 = arith.constant 0 : i32
    return %c0_i32, %c0_i32_0 : i32, i32
  }
  func.func @transform_5(%arg0: i32) -> (i32, i32) {
    %c0_i32 = arith.constant 0 : i32
    %c0_i32_0 = arith.constant 0 : i32
    %c0_i32_1 = arith.constant 0 : i32
    return %c0_i32, %c0_i32_0 : i32, i32
  }
  func.func @transform_6(%arg0: i32) -> (i32, i32) {
    %c0_i32 = arith.constant 0 : i32
    %c0_i32_0 = arith.constant 0 : i32
    %c0_i32_1 = arith.constant 0 : i32
    return %c0_i32, %c0_i32_0 : i32, i32
  }
  func.func @transform_7(%arg0: i32) -> (i32, i32) {
    %c0_i32 = arith.constant 0 : i32
    %c0_i32_0 = arith.constant 0 : i32
    %c0_i32_1 = arith.constant 0 : i32
    return %c0_i32, %c0_i32_0 : i32, i32
  }
  func.func @transform_8(%arg0: i32) -> (i32, i32, i32) {
    %c0_i32 = arith.constant 0 : i32
    %c0_i32_0 = arith.constant 0 : i32
    %c0_i32_1 = arith.constant 0 : i32
    return %arg0, %c0_i32, %c0_i32_0 : i32, i32, i32
  }
}

</mosaic_0001>

<llo_original>
// kernel: tpu_custom_call.1
$region0: #{tpu_custom_call.1}
  #allocation0 [shape = 'u32[]', space=smem, size = 0x4, offset = 0x4, fixed_abs, tag = 'smem constant byte address 0x4 - core index']
  #allocation1 [shape = 'u32[72,128]{1,0:T(1,128)}', space=vmem, size = 0x9000, scoped, tag = 'internal scratch']
  %s0 = inlined_call_operand.hbm [shape: bf16[4,8,24], index: 0, kind: input, shape index: {}]
  %s1 = inlined_call_operand.hbm [shape: bf16[4,16,40], index: 1, kind: input, shape index: {}]
  %s2 = inlined_call_operand.hbm [shape: bf16[24,32], index: 2, kind: input, shape index: {}]
  %s3 = inlined_call_operand.vmem [shape: f32[1,32], index: 3, kind: input, shape index: {}]
  %s4 = inlined_call_operand.hbm [shape: bf16[40,64], index: 4, kind: input, shape index: {}]
  %s5 = inlined_call_operand.vmem [shape: f32[1,64], index: 5, kind: input, shape index: {}]
  %s6 = inlined_call_operand.hbm [shape: bf16[32,32], index: 6, kind: input, shape index: {}]
  %s7 = inlined_call_operand.vmem [shape: f32[1,32], index: 7, kind: input, shape index: {}]
  %s8 = inlined_call_operand.hbm [shape: f32[4,8,32], index: 8, kind: output, shape index: {}]
  %s9 = sld [smem:[#allocation0]]
  $region85: #{tpu_custom_call.1} parent=0
    _
  %s11 = ssub.s32 1, %s9
  %s12 = scalar_select 0, %s11, %s9
  $region1: #{tpu_custom_call.1} parent=0
    #allocation2 [shape = 'u8[8192]{0}', space=vmem, size = 0x2000, scoped, tag = 'input window, operand 0']
    #allocation3 [shape = 's32[2]{0}', space=sflag, size = 0x8, scoped, tag = 'scoped memory for tpu_custom_call.1']
    #allocation4 [shape = 's32[2]{0}', space=sflag, size = 0x8, scoped, tag = 'scoped memory for tpu_custom_call.1']
    #allocation5 [shape = 'u8[16384]{0}', space=vmem, size = 0x4000, scoped, tag = 'input window, operand 1']
    #allocation6 [shape = 's32[2]{0}', space=sflag, size = 0x8, scoped, tag = 'scoped memory for tpu_custom_call.1']
    #allocation7 [shape = 'u8[6144]{0}', space=vmem, size = 0x1800, scoped, tag = 'input window, operand 2, single buffered']
    #allocation8 [shape = 'u8[10240]{0}', space=vmem, size = 0x2800, scoped, tag = 'input window, operand 4, single buffered']
    #allocation9 [shape = 's32[1]{0}', space=sflag, size = 0x4, scoped, tag = 'scoped memory for tpu_custom_call.1']
    #allocation10 [shape = 'u8[8192]{0}', space=vmem, size = 0x2000, scoped, tag = 'input window, operand 6, single buffered']
    #allocation11 [shape = 'u8[16384]{0}', space=vmem, size = 0x4000, scoped, tag = 'output window, operand 0']
    %13 = vsyncpa [#allocation3], 0
    %s14 = scalar_lea.sflag [#allocation3], 1
    %15 = vsyncpa %s14, 0
    %16 = vsyncpa [#allocation6], 0
    %s17 = scalar_lea.sflag [#allocation6], 1
    %18 = vsyncpa %s17, 0
    %19 = vsyncpa [#allocation9], 0
    %20 = vsyncpa [#allocation4], 0
    %s21 = scalar_lea.sflag [#allocation4], 1
    %22 = vsyncpa %s21, 0
    loop: start=0, step=1, limit=4
    $region2: #{tpu_custom_call.1} parent=1 // loop_pre_header
      _
    $region3: #{tpu_custom_call.1} parent=1 // loop_header
      %s24 = sphi 0, %s28
      %p25 = scmp.ge.s32.totalorder %s24, 4
      %s34 = sphi 0, %s36
      %s37 = sphi 0, %s34
      %s38 = sphi 0, %s37
      %s54 = sphi 0, %s38
      %s60 = sphi 0, %s62
      %s63 = sphi 0, %s60
      %s64 = sphi 0, %s63
      %s80 = sphi 0, %s64
      %s84 = sphi 0, %s84
      %s86 = sphi 0, %s84
      %s87 = sphi 0, %s86
      %s101 = sphi 0, %s87
      %s105 = sphi 0, %s105
      %s107 = sphi 0, %s105
      %s108 = sphi 0, %s107
      %s122 = sphi 0, %s108
      %s126 = sphi 0, %s126
      %s128 = sphi 0, %s126
      %s129 = sphi 0, %s128
      %s143 = sphi 0, %s129
      %s147 = sphi 0, %s147
      %s149 = sphi 0, %s147
      %s150 = sphi 0, %s149
      %s164 = sphi 0, %s150
      %s168 = sphi 0, %s168
      %s170 = sphi 0, %s168
      %s171 = sphi 0, %s170
      %s185 = sphi 0, %s171
      %s189 = sphi 0, %s189
      %s191 = sphi 0, %s189
      %s192 = sphi 0, %s191
      %s206 = sphi 0, %s192
      %s212 = sphi 0, %s214
      %s215 = sphi 0, %s212
      %s216 = sphi 0, %s215
      %s232 = sphi 0, %s216
    $region4: #{tpu_custom_call.1} parent=1 // loop_header_branch
      %27 = sbr.rel (%p25) target = $region8
    $region5: #{tpu_custom_call.1} parent=1 // loop_body
      %s29 = ssub.s32 %s24, 1
      %s30 = ssub.s32 %s24, 2
      %s31 = sadd.s32 %s24, 1
      %s32 = ssub.s32 %s24, %s31
      %p33 = scmp.eq.s32.totalorder %s32, 0
      %s35 = sadd.s32 %s34, 1
      %s36 = scalar_select %p33, %s34, %s35
      %p39 = pneg %p33
      %p40 = scmp.eq.s32.totalorder %s24, 1
      %p41 = por %p39, %p40
      %p42 = scmp.ne.s32.totalorder %s34, %s37
      %p43 = scmp.eq.s32.totalorder %s24, 0
      %p44 = por %p42, %p43
      %p45 = scmp.ne.s32.totalorder %s34, %s37
      %p46 = scmp.eq.s32.totalorder %s29, 1
      %p47 = por %p45, %p46
      %p48 = scmp.ne.s32.totalorder %s37, %s38
      %p49 = scmp.eq.s32.totalorder %s29, 0
      %p50 = por %p48, %p49
      %p51 = scmp.ne.s32.totalorder %s37, %s38
      %p52 = scmp.eq.s32.totalorder %s30, 1
      %p53 = por %p51, %p52
      %p55 = scmp.ne.s32.totalorder %s38, %s54
      %p56 = scmp.eq.s32.totalorder %s30, 0
      %p57 = por %p55, %p56
      %s58 = ssub.s32 %s24, %s31
      %p59 = scmp.eq.s32.totalorder %s58, 0
      %s61 = sadd.s32 %s60, 1
      %s62 = scalar_select %p59, %s60, %s61
      %p65 = pneg %p59
      %p66 = scmp.eq.s32.totalorder %s24, 1
      %p67 = por %p65, %p66
      %p68 = scmp.ne.s32.totalorder %s60, %s63
      %p69 = scmp.eq.s32.totalorder %s24, 0
      %p70 = por %p68, %p69
      %p71 = scmp.ne.s32.totalorder %s60, %s63
      %p72 = scmp.eq.s32.totalorder %s29, 1
      %p73 = por %p71, %p72
      %p74 = scmp.ne.s32.totalorder %s63, %s64
      %p75 = scmp.eq.s32.totalorder %s29, 0
      %p76 = por %p74, %p75
      %p77 = scmp.ne.s32.totalorder %s63, %s64
      %p78 = scmp.eq.s32.totalorder %s30, 1
      %p79 = por %p77, %p78
      %p81 = scmp.ne.s32.totalorder %s64, %s80
      %p82 = scmp.eq.s32.totalorder %s30, 0
      %p83 = por %p81, %p82
      %s85 = sadd.s32 %s84, 1
      %p88 = scmp.eq.s32.totalorder %s24, 1
      %p89 = scmp.ne.s32.totalorder %s84, %s86
      %p90 = scmp.eq.s32.totalorder %s24, 0
      %p91 = por %p89, %p90
      %p92 = scmp.ne.s32.totalorder %s84, %s86
      %p93 = scmp.eq.s32.totalorder %s29, 1
      %p94 = por %p92, %p93
      %p95 = scmp.ne.s32.totalorder %s86, %s87
      %p96 = scmp.eq.s32.totalorder %s29, 0
      %p97 = por %p95, %p96
      %p98 = scmp.ne.s32.totalorder %s86, %s87
      %p99 = scmp.eq.s32.totalorder %s30, 1
      %p100 = por %p98, %p99
      %p102 = scmp.ne.s32.totalorder %s87, %s101
      %p103 = scmp.eq.s32.totalorder %s30, 0
      %p104 = por %p102, %p103
      %s106 = sadd.s32 %s105, 1
      %p109 = scmp.eq.s32.totalorder %s24, 1
      %p110 = scmp.ne.s32.totalorder %s105, %s107
      %p111 = scmp.eq.s32.totalorder %s24, 0
      %p112 = por %p110, %p111
      %p113 = scmp.ne.s32.totalorder %s105, %s107
      %p114 = scmp.eq.s32.totalorder %s29, 1
      %p115 = por %p113, %p114
      %p116 = scmp.ne.s32.totalorder %s107, %s108
      %p117 = scmp.eq.s32.totalorder %s29, 0
      %p118 = por %p116, %p117
      %p119 = scmp.ne.s32.totalorder %s107, %s108
      %p120 = scmp.eq.s32.totalorder %s30, 1
      %p121 = por %p119, %p120
      %p123 = scmp.ne.s32.totalorder %s108, %s122
      %p124 = scmp.eq.s32.totalorder %s30, 0
      %p125 = por %p123, %p124
      %s127 = sadd.s32 %s126, 1
      %p130 = scmp.eq.s32.totalorder %s24, 1
      %p131 = scmp.ne.s32.totalorder %s126, %s128
      %p132 = scmp.eq.s32.totalorder %s24, 0
      %p133 = por %p131, %p132
      %p134 = scmp.ne.s32.totalorder %s126, %s128
      %p135 = scmp.eq.s32.totalorder %s29, 1
      %p136 = por %p134, %p135
      %p137 = scmp.ne.s32.totalorder %s128, %s129
      %p138 = scmp.eq.s32.totalorder %s29, 0
      %p139 = por %p137, %p138
      %p140 = scmp.ne.s32.totalorder %s128, %s129
      %p141 = scmp.eq.s32.totalorder %s30, 1
      %p142 = por %p140, %p141
      %p144 = scmp.ne.s32.totalorder %s129, %s143
      %p145 = scmp.eq.s32.totalorder %s30, 0
      %p146 = por %p144, %p145
      %s148 = sadd.s32 %s147, 1
      %p151 = scmp.eq.s32.totalorder %s24, 1
      %p152 = scmp.ne.s32.totalorder %s147, %s149
      %p153 = scmp.eq.s32.totalorder %s24, 0
      %p154 = por %p152, %p153
      %p155 = scmp.ne.s32.totalorder %s147, %s149
      %p156 = scmp.eq.s32.totalorder %s29, 1
      %p157 = por %p155, %p156
      %p158 = scmp.ne.s32.totalorder %s149, %s150
      %p159 = scmp.eq.s32.totalorder %s29, 0
      %p160 = por %p158, %p159
      %p161 = scmp.ne.s32.totalorder %s149, %s150
      %p162 = scmp.eq.s32.totalorder %s30, 1
      %p163 = por %p161, %p162
      %p165 = scmp.ne.s32.totalorder %s150, %s164
      %p166 = scmp.eq.s32.totalorder %s30, 0
      %p167 = por %p165, %p166
      %s169 = sadd.s32 %s168, 1
      %p172 = scmp.eq.s32.totalorder %s24, 1
      %p173 = scmp.ne.s32.totalorder %s168, %s170
      %p174 = scmp.eq.s32.totalorder %s24, 0
      %p175 = por %p173, %p174
      %p176 = scmp.ne.s32.totalorder %s168, %s170
      %p177 = scmp.eq.s32.totalorder %s29, 1
      %p178 = por %p176, %p177
      %p179 = scmp.ne.s32.totalorder %s170, %s171
      %p180 = scmp.eq.s32.totalorder %s29, 0
      %p181 = por %p179, %p180
      %p182 = scmp.ne.s32.totalorder %s170, %s171
      %p183 = scmp.eq.s32.totalorder %s30, 1
      %p184 = por %p182, %p183
      %p186 = scmp.ne.s32.totalorder %s171, %s185
      %p187 = scmp.eq.s32.totalorder %s30, 0
      %p188 = por %p186, %p187
      %s190 = sadd.s32 %s189, 1
      %p193 = scmp.eq.s32.totalorder %s24, 1
      %p194 = scmp.ne.s32.totalorder %s189, %s191
      %p195 = scmp.eq.s32.totalorder %s24, 0
      %p196 = por %p194, %p195
      %p197 = scmp.ne.s32.totalorder %s189, %s191
      %p198 = scmp.eq.s32.totalorder %s29, 1
      %p199 = por %p197, %p198
      %p200 = scmp.ne.s32.totalorder %s191, %s192
      %p201 = scmp.eq.s32.totalorder %s29, 0
      %p202 = por %p200, %p201
      %p203 = scmp.ne.s32.totalorder %s191, %s192
      %p204 = scmp.eq.s32.totalorder %s30, 1
      %p205 = por %p203, %p204
      %p207 = scmp.ne.s32.totalorder %s192, %s206
      %p208 = scmp.eq.s32.totalorder %s30, 0
      %p209 = por %p207, %p208
      %s210 = ssub.s32 %s24, %s31
      %p211 = scmp.eq.s32.totalorder %s210, 0
      %s213 = sadd.s32 %s212, 1
      %s214 = scalar_select %p211, %s212, %s213
      %p217 = pneg %p211
      %p218 = scmp.eq.s32.totalorder %s24, 1
      %p219 = por %p217, %p218
      %p220 = scmp.ne.s32.totalorder %s212, %s215
      %p221 = scmp.eq.s32.totalorder %s24, 0
      %p222 = por %p220, %p221
      %p223 = scmp.ne.s32.totalorder %s212, %s215
      %p224 = scmp.eq.s32.totalorder %s29, 1
      %p225 = por %p223, %p224
      %p226 = scmp.ne.s32.totalorder %s215, %s216
      %p227 = scmp.eq.s32.totalorder %s29, 0
      %p228 = por %p226, %p227
      %p229 = scmp.ne.s32.totalorder %s215, %s216
      %p230 = scmp.eq.s32.totalorder %s30, 1
      %p231 = por %p229, %p230
      %p233 = scmp.ne.s32.totalorder %s216, %s232
      %p234 = scmp.eq.s32.totalorder %s30, 0
      %p235 = por %p233, %p234
      %p236 = scmp.le.s32.totalorder 1, %s24
      %p237 = scmp.lt.s32.totalorder %s24, 3
      %p238 = pnand %p236, %p237
      %p239 = pneg %p238
      // Predicated region
      $region9: #{tpu_custom_call.1} parent=5 // pred_check
        _
      $region10: #{tpu_custom_call.1} parent=5 // pred_check_branch
        %241 = sbr.rel (%p238) target = $region12
      $region11: #{tpu_custom_call.1} parent=5 // pred_region
        %s242 = ssub.s32 %s24, 1
        // Predicated region
        $region13: #{tpu_custom_call.1} parent=11 // pred_check
          %p243 = pneg %p97
        $region14: #{tpu_custom_call.1} parent=11 // pred_check_branch
          %245 = sbr.rel (%p243) target = $region16
        $region15: #{tpu_custom_call.1} parent=11 // pred_region
          %247 = vsyncadd [#allocation6], 0
          %s248 = sshll.u32 %s2, 4
          %s249 = int_to_ptr.hbm [resolvable:$true] %s248
          %s250 = sshll.u32 [#allocation7], 4
          %s251 = int_to_ptr.vmem [resolvable:$true] %s250
          %256 = dma.hbm_to_vmem [thread:$0]  %s249, 192, %s251, [#allocation6], 64, 64, 4
        $region16: #{tpu_custom_call.1} parent=11 // pred_fallthru
          _
        // Predicated region
        $region17: #{tpu_custom_call.1} parent=11 // pred_check
          %p257 = pneg %p118
        $region18: #{tpu_custom_call.1} parent=11 // pred_check_branch
          %259 = sbr.rel (%p257) target = $region20
        $region19: #{tpu_custom_call.1} parent=11 // pred_region
          _
        $region20: #{tpu_custom_call.1} parent=11 // pred_fallthru
          _
        // Predicated region
        $region21: #{tpu_custom_call.1} parent=11 // pred_check
          %p260 = pneg %p139
        $region22: #{tpu_custom_call.1} parent=11 // pred_check_branch
          %262 = sbr.rel (%p260) target = $region24
        $region23: #{tpu_custom_call.1} parent=11 // pred_region
          %264 = vsyncadd [#allocation9], 0
          %s265 = sshll.u32 %s4, 4
          %s266 = int_to_ptr.hbm [resolvable:$true] %s265
          %s267 = sshll.u32 [#allocation8], 4
          %s268 = int_to_ptr.vmem [resolvable:$true] %s267
          %273 = dma.hbm_to_vmem [thread:$0]  %s266, 320, %s268, [#allocation9], 64, 64, 4
        $region24: #{tpu_custom_call.1} parent=11 // pred_fallthru
          _
        // Predicated region
        $region25: #{tpu_custom_call.1} parent=11 // pred_check
          %p274 = pneg %p160
        $region26: #{tpu_custom_call.1} parent=11 // pred_check_branch
          %276 = sbr.rel (%p274) target = $region28
        $region27: #{tpu_custom_call.1} parent=11 // pred_region
          _
        $region28: #{tpu_custom_call.1} parent=11 // pred_fallthru
          _
        // Predicated region
        $region29: #{tpu_custom_call.1} parent=11 // pred_check
          %p277 = pneg %p181
        $region30: #{tpu_custom_call.1} parent=11 // pred_check_branch
          %279 = sbr.rel (%p277) target = $region32
        $region31: #{tpu_custom_call.1} parent=11 // pred_region
          %281 = vsyncadd [#allocation9], 0
          %s282 = sshll.u32 %s6, 4
          %s283 = int_to_ptr.hbm [resolvable:$true] %s282
          %s284 = sshll.u32 [#allocation10], 4
          %s285 = int_to_ptr.vmem [resolvable:$true] %s284
          %290 = dma.hbm_to_vmem [thread:$0]  %s283, 256, %s285, [#allocation9], 64, 64, 4
        $region32: #{tpu_custom_call.1} parent=11 // pred_fallthru
          _
        // Predicated region
        $region33: #{tpu_custom_call.1} parent=11 // pred_check
          %p291 = pneg %p202
        $region34: #{tpu_custom_call.1} parent=11 // pred_check_branch
          %293 = sbr.rel (%p291) target = $region36
        $region35: #{tpu_custom_call.1} parent=11 // pred_region
          _
        $region36: #{tpu_custom_call.1} parent=11 // pred_fallthru
          _
      $region12: #{tpu_custom_call.1} parent=5 // pred_fallthru
        _
      %p294 = scmp.lt.s32.totalorder %s24, 2
      // Predicated region
      $region37: #{tpu_custom_call.1} parent=5 // pred_check
        %p295 = pneg %p294
      $region38: #{tpu_custom_call.1} parent=5 // pred_check_branch
        %297 = sbr.rel (%p295) target = $region40
      $region39: #{tpu_custom_call.1} parent=5 // pred_region
        // Predicated region
        $region41: #{tpu_custom_call.1} parent=39 // pred_check
          %p298 = pneg %p44
        $region42: #{tpu_custom_call.1} parent=39 // pred_check_branch
          %300 = sbr.rel (%p298) target = $region44
        $region43: #{tpu_custom_call.1} parent=39 // pred_region
          %s301 = sand.u32 %s34, 1
          %s302 = scalar_lea.sflag [#allocation3], %s301
          %s303 = sand.u32 %s34, 1
          %s304 = smul.addr %s303, 8
          %s305 = scalar_lea.vmem [#allocation2], %s304
          %s306 = smul.u32 2, %s24
          %308 = vsyncadd %s302, 0
          %s309 = smul.addr %s306, 4
          %s310 = scalar_lea.hbm %s0, %s309
          %s311 = sshll.u32 %s310, 4
          %s312 = int_to_ptr.hbm [resolvable:$true] %s311
          %s313 = sshll.u32 %s305, 4
          %s314 = int_to_ptr.vmem [resolvable:$true] %s313
          %319 = dma.hbm_to_vmem [thread:$0]  %s312, 128, %s314, %s302, 64, 64, 4
        $region44: #{tpu_custom_call.1} parent=39 // pred_fallthru
          _
        // Predicated region
        $region45: #{tpu_custom_call.1} parent=39 // pred_check
          %p320 = pneg %p70
        $region46: #{tpu_custom_call.1} parent=39 // pred_check_branch
          %322 = sbr.rel (%p320) target = $region48
        $region47: #{tpu_custom_call.1} parent=39 // pred_region
          %s323 = sand.u32 %s24, 1
          %s324 = scalar_lea.sflag [#allocation6], %s323
          %s325 = sand.u32 %s60, 1
          %s326 = smul.addr %s325, 16
          %s327 = scalar_lea.vmem [#allocation5], %s326
          %s328 = smul.u32 2, %s24
          %330 = vsyncadd %s324, 0
          %s331 = smul.addr %s328, 2
          %s332 = smul.addr %s331, 4
          %s333 = scalar_lea.hbm %s1, %s332
          %s334 = sshll.u32 %s333, 4
          %s335 = int_to_ptr.hbm [resolvable:$true] %s334
          %s336 = sshll.u32 %s327, 4
          %s337 = int_to_ptr.vmem [resolvable:$true] %s336
          %342 = dma.hbm_to_vmem [thread:$0]  %s335, 256, %s337, %s324, 64, 64, 4
        $region48: #{tpu_custom_call.1} parent=39 // pred_fallthru
          _
      $region40: #{tpu_custom_call.1} parent=5 // pred_fallthru
        _
      %p343 = scmp.le.s32.totalorder 1, %s24
      %p344 = scmp.lt.s32.totalorder %s24, 3
      %p345 = pnand %p343, %p344
      %p346 = pneg %p345
      // Predicated region
      $region49: #{tpu_custom_call.1} parent=5 // pred_check
        _
      $region50: #{tpu_custom_call.1} parent=5 // pred_check_branch
        %348 = sbr.rel (%p345) target = $region52
      $region51: #{tpu_custom_call.1} parent=5 // pred_region
        %s349 = ssub.s32 %s24, 1
        %s350 = sand.u32 %s37, 1
        %s351 = scalar_lea.sflag [#allocation3], %s350
        %s352 = sand.u32 %s37, 1
        %s353 = smul.addr %s352, 8
        %s354 = scalar_lea.vmem [#allocation2], %s353
        // Predicated region
        $region53: #{tpu_custom_call.1} parent=51 // pred_check
          %p355 = pneg %p50
        $region54: #{tpu_custom_call.1} parent=51 // pred_check_branch
          %357 = sbr.rel (%p355) target = $region56
        $region55: #{tpu_custom_call.1} parent=51 // pred_region
          %359 = dma.done %s351, 128
        $region56: #{tpu_custom_call.1} parent=51 // pred_fallthru
          _
        %s360 = sand.u32 %s29, 1
        %s361 = scalar_lea.sflag [#allocation6], %s360
        %s362 = sand.u32 %s63, 1
        %s363 = smul.addr %s362, 16
        %s364 = scalar_lea.vmem [#allocation5], %s363
        // Predicated region
        $region57: #{tpu_custom_call.1} parent=51 // pred_check
          %p365 = pneg %p76
        $region58: #{tpu_custom_call.1} parent=51 // pred_check_branch
          %367 = sbr.rel (%p365) target = $region60
        $region59: #{tpu_custom_call.1} parent=51 // pred_region
          %369 = dma.done %s361, 256
        $region60: #{tpu_custom_call.1} parent=51 // pred_fallthru
          _
        // Predicated region
        $region61: #{tpu_custom_call.1} parent=51 // pred_check
          %p370 = pneg %p97
        $region62: #{tpu_custom_call.1} parent=51 // pred_check_branch
          %372 = sbr.rel (%p370) target = $region64
        $region63: #{tpu_custom_call.1} parent=51 // pred_region
          %374 = dma.done [#allocation6], 192
        $region64: #{tpu_custom_call.1} parent=51 // pred_fallthru
          _
        // Predicated region
        $region65: #{tpu_custom_call.1} parent=51 // pred_check
          %p375 = pneg %p139
        $region66: #{tpu_custom_call.1} parent=51 // pred_check_branch
          %377 = sbr.rel (%p375) target = $region68
        $region67: #{tpu_custom_call.1} parent=51 // pred_region
          %379 = dma.done [#allocation9], 320
        $region68: #{tpu_custom_call.1} parent=51 // pred_fallthru
          _
        // Predicated region
        $region69: #{tpu_custom_call.1} parent=51 // pred_check
          %p380 = pneg %p181
        $region70: #{tpu_custom_call.1} parent=51 // pred_check_branch
          %382 = sbr.rel (%p380) target = $region72
        $region71: #{tpu_custom_call.1} parent=51 // pred_region
          %384 = dma.done [#allocation9], 256
        $region72: #{tpu_custom_call.1} parent=51 // pred_fallthru
          _
        %s385 = sand.u32 %s37, 1
        %s386 = scalar_lea.sflag [#allocation3], %s385
        %s387 = sand.u32 %s37, 1
        %s388 = smul.addr %s387, 8
        %s389 = scalar_lea.vmem [#allocation2], %s388
        %p390 = pneg %p50
        %p391 = pneg %p47
        %s392 = sand.u32 %s29, 1
        %s393 = scalar_lea.sflag [#allocation6], %s392
        %s394 = sand.u32 %s63, 1
        %s395 = smul.addr %s394, 16
        %s396 = scalar_lea.vmem [#allocation5], %s395
        %p397 = pneg %p76
        %p398 = pneg %p73
        %p399 = pneg %p97
        %p400 = pneg %p94
        %p401 = pneg %p118
        %p402 = pneg %p115
        %p403 = pneg %p139
        %p404 = pneg %p136
        %p405 = pneg %p160
        %p406 = pneg %p157
        %p407 = pneg %p181
        %p408 = pneg %p178
        %p409 = pneg %p202
        %p410 = pneg %p199
        %p411 = pneg %p228
        %p412 = pneg %p225
        %s413 = sand.u32 %s215, 1
        %s414 = scalar_lea.sflag [#allocation4], %s413
        %s415 = sand.u32 %s215, 1
        %s416 = smul.addr %s415, 16
        %s417 = scalar_lea.vmem [#allocation11], %s416
        %s418 = smul.u32 2, %s29
        %s419 = smul.u32 2, %s29
        %s420 = smul.u32 2, %s29
        %v422 = vld [vmem:[%s354] sm:$0xf]
        %v423 = vld [vmem:[%s354 + $0x4] sm:$0xf]
        %v424 = vld [vmem:[%s364] sm:$0xf]
        %v425 = vld [vmem:[%s364 + $0x4] sm:$0xf]
        %v426 = vld [vmem:[%s364 + $0x8] sm:$0xf]
        %v427 = vld [vmem:[%s364 + $0xc] sm:$0xf]
        %v428 = vld [vmem:[#allocation7] sm:$0xf]
        %v429 = vld [vmem:[#allocation7 + $0x4] sm:$0xf]
        %v430 = vld [vmem:[#allocation7 + $0x8] sm:$0xf]
        %v431 = vld [vmem:[%s3] sm:$0x1]
        %v433 = vperm.slane %v431, 0
        %v437 = vunpack.c.l.b16 %v422
        %v438 = vunpack.c.l.b16 %v423
        %v439 = vpack.c.b16 %v438, %v437
        %v443 = vunpack.c.l.b16 %v428
        %v444 = vunpack.c.l.b16 %v429
        %v445 = vunpack.c.l.b16 %v430
        %v446 = vpack.c.b16 %v444, %v443
        %v447 = vpack.c.b16 %v445, %v445
        %vm449 = vcmask 195584
        %v451 = vsel %vm449, %v439, 0
        %vm453 = vcmask 1043456
        %v455 = vsel %vm453, %v447, 0
        %457 = vmatpush.bf16.msra.mxu0 0
        %458 = vmatpush.bf16.msra.mxu0 0
        %459 = vmatpush.bf16.msra.mxu0 0
        %460 = vmatpush.bf16.msra.mxu0 0
        %461 = vmatpush.bf16.msra.mxu0 0
        %462 = vmatpush.bf16.msra.mxu0 0
        %463 = vmatpush.bf16.msra.mxu0 %v455
        %464 = vmatpush.bf16.msra.mxu0 %v446
        %465 = vmatmul.bf16.gmra.mxu0 %v451
        %v466 = vpop.f32.mrf.mxu0
        %v467 = vadd.f32 %v433, %v466
        %v468 = vpop.f32.mrf.mxu0
        %v469 = vadd.f32 %v433, %v468
        %470 = vdwg.mxu0
        %v471 = vld [vmem:[#allocation8] sm:$0xf]
        %v472 = vld [vmem:[#allocation8 + $0x4] sm:$0xf]
        %v473 = vld [vmem:[#allocation8 + $0x8] sm:$0xf]
        %v474 = vld [vmem:[#allocation8 + $0xc] sm:$0xf]
        %v475 = vld [vmem:[#allocation8 + $0x10] sm:$0xf]
        %v476 = vld [vmem:[%s5] sm:$0x1]
        %v478 = vperm.slane %v476, 0
        %v484 = vunpack.c.l.b16 %v424
        %v485 = vunpack.c.l.b16 %v425
        %v486 = vunpack.c.l.b16 %v426
        %v487 = vunpack.c.l.b16 %v427
        %v488 = vpack.c.b16 %v485, %v484
        %v489 = vpack.c.b16 %v487, %v486
        %v495 = vunpack.c.l.b16 %v471
        %v496 = vunpack.c.l.b16 %v472
        %v497 = vunpack.c.l.b16 %v473
        %v498 = vunpack.c.l.b16 %v474
        %v499 = vunpack.c.l.b16 %v475
        %v500 = vpack.c.b16 %v496, %v495
        %v501 = vpack.c.b16 %v498, %v497
        %v502 = vpack.c.b16 %v499, %v499
        %vm505 = vcmask 326656
        %v507 = vsel %vm505, %v488, 0
        %v510 = vsel %vm505, %v489, 0
        %v513 = vsel %vm453, %v502, 0
        %515 = vmatpush.bf16.msra.mxu0 0
        %516 = vmatpush.bf16.msra.mxu0 0
        %517 = vmatpush.bf16.msra.mxu0 0
        %518 = vmatpush.bf16.msra.mxu0 0
        %519 = vmatpush.bf16.msra.mxu0 0
        %520 = vmatpush.bf16.msra.mxu0 %v513
        %521 = vmatpush.bf16.msra.mxu0 %v501
        %522 = vmatpush.bf16.msra.mxu0 %v500
        %523 = vmatmul.bf16.gmra.mxu0 %v507
        %v524 = vpop.f32.mrf.mxu0
        %v525 = vadd.f32 %v478, %v524
        %v526 = vpop.f32.mrf.mxu0
        %v527 = vadd.f32 %v478, %v526
        %528 = vmatmul.bf16.gmra.mxu0 %v510
        %v529 = vpop.f32.mrf.mxu0
        %v530 = vadd.f32 %v478, %v529
        %v531 = vpop.f32.mrf.mxu0
        %v532 = vadd.f32 %v478, %v531
        %533 = vdwg.mxu0
        %v534 = vpack.c.bf16 %v467, %v467
        %v535 = vpack.c.bf16 %v469, %v469
        %v536 = vpack.c.bf16 %v525, %v525
        %v537 = vpack.c.bf16 %v527, %v527
        %v538 = vpack.c.bf16 %v530, %v530
        %v539 = vpack.c.bf16 %v532, %v532
        %v542 = vunpack.c.l.b16 %v536
        %v543 = vunpack.c.l.b16 %v537
        %v544 = vpack.c.b16 %v543, %v542
        %vm545 = vcmask 64512
        %v547 = vsel %vm545, %v534, 0
        %v550 = vsel %vm545, %v544, 0
        %552 = vmatpush.bf16.xpose.msra.mxu0 0
        %553 = vmatpush.bf16.xpose.msra.mxu0 0
        %554 = vmatpush.bf16.xpose.msra.mxu0 0
        %555 = vmatpush.bf16.xpose.msra.mxu0 0
        %556 = vmatpush.bf16.xpose.msra.mxu0 0
        %557 = vmatpush.bf16.xpose.msra.mxu0 0
        %558 = vmatpush.bf16.xpose.msra.mxu0 0
        %559 = vmatpush.bf16.xpose.msra.mxu0 %v550
        %560 = vmatmul.bf16.gmra.mxu0 %v547
        %v561 = vpop.f32.mrf.mxu0
        %v562 = vadd.f32 0.0, %v561
        %v563 = vpop.f32.mrf.mxu0
        %564 = vdwg.mxu0
        %v567 = vunpack.c.l.b16 %v538
        %v568 = vunpack.c.l.b16 %v539
        %v569 = vpack.c.b16 %v568, %v567
        %v571 = vsel %vm545, %v535, 0
        %v574 = vsel %vm545, %v569, 0
        %576 = vmatpush.bf16.xpose.msra.mxu0 0
        %577 = vmatpush.bf16.xpose.msra.mxu0 0
        %578 = vmatpush.bf16.xpose.msra.mxu0 0
        %579 = vmatpush.bf16.xpose.msra.mxu0 0
        %580 = vmatpush.bf16.xpose.msra.mxu0 0
        %581 = vmatpush.bf16.xpose.msra.mxu0 0
        %582 = vmatpush.bf16.xpose.msra.mxu0 0
        %583 = vmatpush.bf16.xpose.msra.mxu0 %v574
        %584 = vmatmul.bf16.gmra.mxu0 %v571
        %v585 = vpop.f32.mrf.mxu0
        %v586 = vadd.f32 0.0, %v585
        %v587 = vpop.f32.mrf.mxu0
        %588 = vdwg.mxu0
        %vm589 = vcmask 130048
        %v590 = vsel %vm589, %v562, -inf
        %591 = vmax.xlane.f32.xlu0 %v590
        %v592 = vpop.xlane.xlu0 %591
        %v593 = vsel %vm589, %v586, -inf
        %594 = vmax.xlane.f32.xlu0 %v593
        %v595 = vpop.xlane.xlu0 %594
        %v596 = vsub.f32 %v562, %v592
        %v597 = vsub.f32 %v586, %v595
        %v598 = vmul.f32 %v596, 1.442695
        %v599 = vpow.pop %v598
        %v600 = vmul.f32 %v597, 1.442695
        %v601 = vpow.pop %v600
        %v602 = vsel %vm589, %v599, 0.0
        %603 = vadd.xlane.f32.xlu0 %v602
        %v604 = vpop.xlane.xlu0 %603
        %v605 = vsel %vm589, %v601, 0.0
        %606 = vadd.xlane.f32.xlu0 %v605
        %v607 = vpop.xlane.xlu0 %606
        %v608 = vrcp.pop %v604
        %v609 = vrcp.pop %v607
        %v610 = vmul.f32 %v599, %v608
        %v611 = vmul.f32 %v601, %v609
        %v612 = vpack.c.bf16 %v610, %v610
        %v613 = vpack.c.bf16 %v611, %v611
        %614 = vrot.lane.b32.xlu0 %v544, 96
        %v615 = vpop.permute.xlu0 %614
        %v618 = vsel %vm589, %v612, 0
        %620 = vmatpush.bf16.msra.mxu0 0
        %621 = vmatpush.bf16.msra.mxu0 0
        %622 = vmatpush.bf16.msra.mxu0 0
        %623 = vmatpush.bf16.msra.mxu0 0
        %624 = vmatpush.bf16.msra.mxu0 0
        %625 = vmatpush.bf16.msra.mxu0 0
        %626 = vmatpush.bf16.msra.mxu0 0
        %627 = vmatpush.bf16.msra.mxu0 %v615
        %628 = vmatmul.bf16.gmra.mxu0 %v618
        %v629 = vpop.f32.mrf.mxu0
        %v630 = vadd.f32 0.0, %v629
        %v631 = vpop.f32.mrf.mxu0
        %632 = vdwg.mxu0
        %633 = vrot.lane.b32.xlu0 %v569, 96
        %v634 = vpop.permute.xlu0 %633
        %v637 = vsel %vm589, %v613, 0
        %639 = vmatpush.bf16.msra.mxu0 0
        %640 = vmatpush.bf16.msra.mxu0 0
        %641 = vmatpush.bf16.msra.mxu0 0
        %642 = vmatpush.bf16.msra.mxu0 0
        %643 = vmatpush.bf16.msra.mxu0 0
        %644 = vmatpush.bf16.msra.mxu0 0
        %645 = vmatpush.bf16.msra.mxu0 0
        %646 = vmatpush.bf16.msra.mxu0 %v634
        %647 = vmatmul.bf16.gmra.mxu0 %v637
        %v648 = vpop.f32.mrf.mxu0
        %v649 = vadd.f32 0.0, %v648
        %v650 = vpop.f32.mrf.mxu0
        %651 = vdwg.mxu0
        %v652 = vadd.f32 %v467, %v630
        %v653 = vadd.f32 %v469, %v649
        %v655 = vunpack.c.l.b16 %v534
        %v656 = vpack.c.b16 %v655, %v655
        %657 = vrot.lane.b32.xlu0 %v656, 120
        %v658 = vpop.permute.xlu0 %657
        %659 = vrot.lane.b32.xlu0 %v544, 120
        %v660 = vpop.permute.xlu0 %659
        %v662 = vsel %vm545, %v658, 0
        %v665 = vsel %vm545, %v660, 0
        %667 = vmatpush.bf16.xpose.msra.mxu0 0
        %668 = vmatpush.bf16.xpose.msra.mxu0 0
        %669 = vmatpush.bf16.xpose.msra.mxu0 0
        %670 = vmatpush.bf16.xpose.msra.mxu0 0
        %671 = vmatpush.bf16.xpose.msra.mxu0 0
        %672 = vmatpush.bf16.xpose.msra.mxu0 0
        %673 = vmatpush.bf16.xpose.msra.mxu0 0
        %674 = vmatpush.bf16.xpose.msra.mxu0 %v665
        %675 = vmatmul.bf16.gmra.mxu0 %v662
        %v676 = vpop.f32.mrf.mxu0
        %v677 = vadd.f32 0.0, %v676
        %v678 = vpop.f32.mrf.mxu0
        %679 = vdwg.mxu0
        %v681 = vunpack.c.l.b16 %v535
        %v682 = vpack.c.b16 %v681, %v681
        %683 = vrot.lane.b32.xlu0 %v682, 120
        %v684 = vpop.permute.xlu0 %683
        %685 = vrot.lane.b32.xlu0 %v569, 120
        %v686 = vpop.permute.xlu0 %685
        %v688 = vsel %vm545, %v684, 0
        %v691 = vsel %vm545, %v686, 0
        %693 = vmatpush.bf16.xpose.msra.mxu0 0
        %694 = vmatpush.bf16.xpose.msra.mxu0 0
        %695 = vmatpush.bf16.xpose.msra.mxu0 0
        %696 = vmatpush.bf16.xpose.msra.mxu0 0
        %697 = vmatpush.bf16.xpose.msra.mxu0 0
        %698 = vmatpush.bf16.xpose.msra.mxu0 0
        %699 = vmatpush.bf16.xpose.msra.mxu0 0
        %700 = vmatpush.bf16.xpose.msra.mxu0 %v691
        %701 = vmatmul.bf16.gmra.mxu0 %v688
        %v702 = vpop.f32.mrf.mxu0
        %v703 = vadd.f32 0.0, %v702
        %v704 = vpop.f32.mrf.mxu0
        %705 = vdwg.mxu0
        %v706 = vsel %vm589, %v677, -inf
        %707 = vmax.xlane.f32.xlu0 %v706
        %v708 = vpop.xlane.xlu0 %707
        %v709 = vsel %vm589, %v703, -inf
        %710 = vmax.xlane.f32.xlu0 %v709
        %v711 = vpop.xlane.xlu0 %710
        %v712 = vsub.f32 %v677, %v708
        %v713 = vsub.f32 %v703, %v711
        %v714 = vmul.f32 %v712, 1.442695
        %v715 = vpow.pop %v714
        %v716 = vmul.f32 %v713, 1.442695
        %v717 = vpow.pop %v716
        %v718 = vsel %vm589, %v715, 0.0
        %719 = vadd.xlane.f32.xlu0 %v718
        %v720 = vpop.xlane.xlu0 %719
        %v721 = vsel %vm589, %v717, 0.0
        %722 = vadd.xlane.f32.xlu0 %v721
        %v723 = vpop.xlane.xlu0 %722
        %v724 = vrcp.pop %v720
        %v725 = vrcp.pop %v723
        %v726 = vmul.f32 %v715, %v724
        %v727 = vmul.f32 %v717, %v725
        %v728 = vpack.c.bf16 %v726, %v726
        %v729 = vpack.c.bf16 %v727, %v727
        %730 = vrot.lane.b32.xlu0 %v544, 88
        %v731 = vpop.permute.xlu0 %730
        %v734 = vsel %vm589, %v728, 0
        %736 = vmatpush.bf16.msra.mxu0 0
        %737 = vmatpush.bf16.msra.mxu0 0
        %738 = vmatpush.bf16.msra.mxu0 0
        %739 = vmatpush.bf16.msra.mxu0 0
        %740 = vmatpush.bf16.msra.mxu0 0
        %741 = vmatpush.bf16.msra.mxu0 0
        %742 = vmatpush.bf16.msra.mxu0 0
        %743 = vmatpush.bf16.msra.mxu0 %v731
        %744 = vmatmul.bf16.gmra.mxu0 %v734
        %v745 = vpop.f32.mrf.mxu0
        %v746 = vadd.f32 0.0, %v745
        %v747 = vpop.f32.mrf.mxu0
        %748 = vdwg.mxu0
        %749 = vrot.lane.b32.xlu0 %v569, 88
        %v750 = vpop.permute.xlu0 %749
        %v753 = vsel %vm589, %v729, 0
        %755 = vmatpush.bf16.msra.mxu0 0
        %756 = vmatpush.bf16.msra.mxu0 0
        %757 = vmatpush.bf16.msra.mxu0 0
        %758 = vmatpush.bf16.msra.mxu0 0
        %759 = vmatpush.bf16.msra.mxu0 0
        %760 = vmatpush.bf16.msra.mxu0 0
        %761 = vmatpush.bf16.msra.mxu0 0
        %762 = vmatpush.bf16.msra.mxu0 %v750
        %763 = vmatmul.bf16.gmra.mxu0 %v753
        %v764 = vpop.f32.mrf.mxu0
        %v765 = vadd.f32 0.0, %v764
        %v766 = vpop.f32.mrf.mxu0
        %767 = vdwg.mxu0
        %770 = vrot.lane.b32.xlu0 %v746, 8
        %v771 = vpop.permute.xlu0 %770
        %772 = vrot.lane.b32.xlu0 %v765, 8
        %v773 = vpop.permute.xlu0 %772
        %v776 = vadd.f32 %v467, %v771
        %v777 = vadd.f32 %v469, %v773
        %778 = vrot.lane.b32.xlu0 %v656, 112
        %v779 = vpop.permute.xlu0 %778
        %780 = vrot.lane.b32.xlu0 %v544, 112
        %v781 = vpop.permute.xlu0 %780
        %v783 = vsel %vm545, %v779, 0
        %v786 = vsel %vm545, %v781, 0
        %788 = vmatpush.bf16.xpose.msra.mxu0 0
        %789 = vmatpush.bf16.xpose.msra.mxu0 0
        %790 = vmatpush.bf16.xpose.msra.mxu0 0
        %791 = vmatpush.bf16.xpose.msra.mxu0 0
        %792 = vmatpush.bf16.xpose.msra.mxu0 0
        %793 = vmatpush.bf16.xpose.msra.mxu0 0
        %794 = vmatpush.bf16.xpose.msra.mxu0 0
        %795 = vmatpush.bf16.xpose.msra.mxu0 %v786
        %796 = vmatmul.bf16.gmra.mxu0 %v783
        %v797 = vpop.f32.mrf.mxu0
        %v798 = vadd.f32 0.0, %v797
        %v799 = vpop.f32.mrf.mxu0
        %800 = vdwg.mxu0
        %801 = vrot.lane.b32.xlu0 %v682, 112
        %v802 = vpop.permute.xlu0 %801
        %803 = vrot.lane.b32.xlu0 %v569, 112
        %v804 = vpop.permute.xlu0 %803
        %v806 = vsel %vm545, %v802, 0
        %v809 = vsel %vm545, %v804, 0
        %811 = vmatpush.bf16.xpose.msra.mxu0 0
        %812 = vmatpush.bf16.xpose.msra.mxu0 0
        %813 = vmatpush.bf16.xpose.msra.mxu0 0
        %814 = vmatpush.bf16.xpose.msra.mxu0 0
        %815 = vmatpush.bf16.xpose.msra.mxu0 0
        %816 = vmatpush.bf16.xpose.msra.mxu0 0
        %817 = vmatpush.bf16.xpose.msra.mxu0 0
        %818 = vmatpush.bf16.xpose.msra.mxu0 %v809
        %819 = vmatmul.bf16.gmra.mxu0 %v806
        %v820 = vpop.f32.mrf.mxu0
        %v821 = vadd.f32 0.0, %v820
        %v822 = vpop.f32.mrf.mxu0
        %823 = vdwg.mxu0
        %v824 = vsel %vm589, %v798, -inf
        %825 = vmax.xlane.f32.xlu0 %v824
        %v826 = vpop.xlane.xlu0 %825
        %v827 = vsel %vm589, %v821, -inf
        %828 = vmax.xlane.f32.xlu0 %v827
        %v829 = vpop.xlane.xlu0 %828
        %v830 = vsub.f32 %v798, %v826
        %v831 = vsub.f32 %v821, %v829
        %v832 = vmul.f32 %v830, 1.442695
        %v833 = vpow.pop %v832
        %v834 = vmul.f32 %v831, 1.442695
        %v835 = vpow.pop %v834
        %v836 = vsel %vm589, %v833, 0.0
        %837 = vadd.xlane.f32.xlu0 %v836
        %v838 = vpop.xlane.xlu0 %837
        %v839 = vsel %vm589, %v835, 0.0
        %840 = vadd.xlane.f32.xlu0 %v839
        %v841 = vpop.xlane.xlu0 %840
        %v842 = vrcp.pop %v838
        %v843 = vrcp.pop %v841
        %v844 = vmul.f32 %v833, %v842
        %v845 = vmul.f32 %v835, %v843
        %v846 = vpack.c.bf16 %v844, %v844
        %v847 = vpack.c.bf16 %v845, %v845
        %848 = vrot.lane.b32.xlu0 %v544, 80
        %v849 = vpop.permute.xlu0 %848
        %v852 = vsel %vm589, %v846, 0
        %854 = vmatpush.bf16.msra.mxu0 0
        %855 = vmatpush.bf16.msra.mxu0 0
        %856 = vmatpush.bf16.msra.mxu0 0
        %857 = vmatpush.bf16.msra.mxu0 0
        %858 = vmatpush.bf16.msra.mxu0 0
        %859 = vmatpush.bf16.msra.mxu0 0
        %860 = vmatpush.bf16.msra.mxu0 0
        %861 = vmatpush.bf16.msra.mxu0 %v849
        %862 = vmatmul.bf16.gmra.mxu0 %v852
        %v863 = vpop.f32.mrf.mxu0
        %v864 = vadd.f32 0.0, %v863
        %v865 = vpop.f32.mrf.mxu0
        %866 = vdwg.mxu0
        %867 = vrot.lane.b32.xlu0 %v569, 80
        %v868 = vpop.permute.xlu0 %867
        %v871 = vsel %vm589, %v847, 0
        %873 = vmatpush.bf16.msra.mxu0 0
        %874 = vmatpush.bf16.msra.mxu0 0
        %875 = vmatpush.bf16.msra.mxu0 0
        %876 = vmatpush.bf16.msra.mxu0 0
        %877 = vmatpush.bf16.msra.mxu0 0
        %878 = vmatpush.bf16.msra.mxu0 0
        %879 = vmatpush.bf16.msra.mxu0 0
        %880 = vmatpush.bf16.msra.mxu0 %v868
        %881 = vmatmul.bf16.gmra.mxu0 %v871
        %v882 = vpop.f32.mrf.mxu0
        %v883 = vadd.f32 0.0, %v882
        %v884 = vpop.f32.mrf.mxu0
        %885 = vdwg.mxu0
        %888 = vrot.lane.b32.xlu0 %v864, 16
        %v889 = vpop.permute.xlu0 %888
        %890 = vrot.lane.b32.xlu0 %v883, 16
        %v891 = vpop.permute.xlu0 %890
        %v894 = vadd.f32 %v467, %v889
        %v895 = vadd.f32 %v469, %v891
        %896 = vrot.lane.b32.xlu0 %v656, 104
        %v897 = vpop.permute.xlu0 %896
        %898 = vrot.lane.b32.xlu0 %v544, 104
        %v899 = vpop.permute.xlu0 %898
        %v901 = vsel %vm545, %v897, 0
        %v904 = vsel %vm545, %v899, 0
        %906 = vmatpush.bf16.xpose.msra.mxu0 0
        %907 = vmatpush.bf16.xpose.msra.mxu0 0
        %908 = vmatpush.bf16.xpose.msra.mxu0 0
        %909 = vmatpush.bf16.xpose.msra.mxu0 0
        %910 = vmatpush.bf16.xpose.msra.mxu0 0
        %911 = vmatpush.bf16.xpose.msra.mxu0 0
        %912 = vmatpush.bf16.xpose.msra.mxu0 0
        %913 = vmatpush.bf16.xpose.msra.mxu0 %v904
        %914 = vmatmul.bf16.gmra.mxu0 %v901
        %v915 = vpop.f32.mrf.mxu0
        %v916 = vadd.f32 0.0, %v915
        %v917 = vpop.f32.mrf.mxu0
        %918 = vdwg.mxu0
        %919 = vrot.lane.b32.xlu0 %v682, 104
        %v920 = vpop.permute.xlu0 %919
        %921 = vrot.lane.b32.xlu0 %v569, 104
        %v922 = vpop.permute.xlu0 %921
        %v924 = vsel %vm545, %v920, 0
        %v927 = vsel %vm545, %v922, 0
        %929 = vmatpush.bf16.xpose.msra.mxu0 0
        %930 = vmatpush.bf16.xpose.msra.mxu0 0
        %931 = vmatpush.bf16.xpose.msra.mxu0 0
        %932 = vmatpush.bf16.xpose.msra.mxu0 0
        %933 = vmatpush.bf16.xpose.msra.mxu0 0
        %934 = vmatpush.bf16.xpose.msra.mxu0 0
        %935 = vmatpush.bf16.xpose.msra.mxu0 0
        %936 = vmatpush.bf16.xpose.msra.mxu0 %v927
        %937 = vmatmul.bf16.gmra.mxu0 %v924
        %v938 = vpop.f32.mrf.mxu0
        %v939 = vadd.f32 0.0, %v938
        %v940 = vpop.f32.mrf.mxu0
        %941 = vdwg.mxu0
        %v942 = vsel %vm589, %v916, -inf
        %943 = vmax.xlane.f32.xlu0 %v942
        %v944 = vpop.xlane.xlu0 %943
        %v945 = vsel %vm589, %v939, -inf
        %946 = vmax.xlane.f32.xlu0 %v945
        %v947 = vpop.xlane.xlu0 %946
        %v948 = vsub.f32 %v916, %v944
        %v949 = vsub.f32 %v939, %v947
        %v950 = vmul.f32 %v948, 1.442695
        %v951 = vpow.pop %v950
        %v952 = vmul.f32 %v949, 1.442695
        %v953 = vpow.pop %v952
        %v954 = vsel %vm589, %v951, 0.0
        %955 = vadd.xlane.f32.xlu0 %v954
        %v956 = vpop.xlane.xlu0 %955
        %v957 = vsel %vm589, %v953, 0.0
        %958 = vadd.xlane.f32.xlu0 %v957
        %v959 = vpop.xlane.xlu0 %958
        %v960 = vrcp.pop %v956
        %v961 = vrcp.pop %v959
        %v962 = vmul.f32 %v951, %v960
        %v963 = vmul.f32 %v953, %v961
        %v964 = vpack.c.bf16 %v962, %v962
        %v965 = vpack.c.bf16 %v963, %v963
        %966 = vrot.lane.b32.xlu0 %v544, 72
        %v967 = vpop.permute.xlu0 %966
        %v970 = vsel %vm589, %v964, 0
        %972 = vmatpush.bf16.msra.mxu0 0
        %973 = vmatpush.bf16.msra.mxu0 0
        %974 = vmatpush.bf16.msra.mxu0 0
        %975 = vmatpush.bf16.msra.mxu0 0
        %976 = vmatpush.bf16.msra.mxu0 0
        %977 = vmatpush.bf16.msra.mxu0 0
        %978 = vmatpush.bf16.msra.mxu0 0
        %979 = vmatpush.bf16.msra.mxu0 %v967
        %980 = vmatmul.bf16.gmra.mxu0 %v970
        %v981 = vpop.f32.mrf.mxu0
        %v982 = vadd.f32 0.0, %v981
        %v983 = vpop.f32.mrf.mxu0
        %984 = vdwg.mxu0
        %985 = vrot.lane.b32.xlu0 %v569, 72
        %v986 = vpop.permute.xlu0 %985
        %v989 = vsel %vm589, %v965, 0
        %991 = vmatpush.bf16.msra.mxu0 0
        %992 = vmatpush.bf16.msra.mxu0 0
        %993 = vmatpush.bf16.msra.mxu0 0
        %994 = vmatpush.bf16.msra.mxu0 0
        %995 = vmatpush.bf16.msra.mxu0 0
        %996 = vmatpush.bf16.msra.mxu0 0
        %997 = vmatpush.bf16.msra.mxu0 0
        %998 = vmatpush.bf16.msra.mxu0 %v986
        %999 = vmatmul.bf16.gmra.mxu0 %v989
        %v1000 = vpop.f32.mrf.mxu0
        %v1001 = vadd.f32 0.0, %v1000
        %v1002 = vpop.f32.mrf.mxu0
        %1003 = vdwg.mxu0
        %1006 = vrot.lane.b32.xlu0 %v982, 24
        %v1007 = vpop.permute.xlu0 %1006
        %1008 = vrot.lane.b32.xlu0 %v1001, 24
        %v1009 = vpop.permute.xlu0 %1008
        %v1012 = vadd.f32 %v467, %v1007
        %v1013 = vadd.f32 %v469, %v1009
        %v1014 = vsel %vm545, %v652, %v776
        %v1015 = vsel %vm545, %v653, %v777
        %v1016 = vsel %vm589, %v1014, %v894
        %v1017 = vsel %vm589, %v1015, %v895
        %v1018 = vsel %vm449, %v1016, %v1012
        %v1019 = vsel %vm449, %v1017, %v1013
        %v1020 = vpack.c.bf16 %v1019, %v1018
        %v1021 = vld [vmem:[#allocation10] sm:$0xf]
        %v1022 = vld [vmem:[#allocation10 + $0x4] sm:$0xf]
        %v1023 = vld [vmem:[#allocation10 + $0x8] sm:$0xf]
        %v1024 = vld [vmem:[#allocation10 + $0xc] sm:$0xf]
        %v1025 = vld [vmem:[%s7] sm:$0x1]
        %v1027 = vperm.slane %v1025, 0
        %v1033 = vunpack.c.l.b16 %v1021
        %v1034 = vunpack.c.l.b16 %v1022
        %v1035 = vunpack.c.l.b16 %v1023
        %v1036 = vunpack.c.l.b16 %v1024
        %v1037 = vpack.c.b16 %v1034, %v1033
        %v1038 = vpack.c.b16 %v1036, %v1035
        %vm1041 = vcmask 261120
        %v1043 = vsel %vm1041, %v1020, 0
        %1045 = vmatpush.bf16.msra.mxu0 0
        %1046 = vmatpush.bf16.msra.mxu0 0
        %1047 = vmatpush.bf16.msra.mxu0 0
        %1048 = vmatpush.bf16.msra.mxu0 0
        %1049 = vmatpush.bf16.msra.mxu0 0
        %1050 = vmatpush.bf16.msra.mxu0 0
        %1051 = vmatpush.bf16.msra.mxu0 %v1038
        %1052 = vmatpush.bf16.msra.mxu0 %v1037
        %1053 = vmatmul.bf16.gmra.mxu0 %v1043
        %v1054 = vpop.f32.mrf.mxu0
        %v1055 = vadd.f32 %v1027, %v1054
        %v1056 = vpop.f32.mrf.mxu0
        %v1057 = vadd.f32 %v1027, %v1056
        %1058 = vdwg.mxu0
        %v1059 = vmax.f32 %v1055, 0.0
        %v1060 = vmax.f32 %v1057, 0.0
        %v1061 = vadd.f32 %v1018, %v1059
        %v1062 = vadd.f32 %v1019, %v1060
        %1063 = vst.msk [vmem:[%s417] sm:$0xff] %vm1041, %v1061
        %1064 = vst.msk [vmem:[%s417 + $0x8] sm:$0xff] %vm1041, %v1062
        %s1065 = sand.u32 %s215, 1
        %s1066 = scalar_lea.sflag [#allocation4], %s1065
        %s1067 = sand.u32 %s215, 1
        %s1068 = smul.addr %s1067, 16
        %s1069 = scalar_lea.vmem [#allocation11], %s1068
        // Predicated region
        $region73: #{tpu_custom_call.1} parent=51 // pred_check
          %p1070 = pneg %p225
        $region74: #{tpu_custom_call.1} parent=51 // pred_check_branch
          %1072 = sbr.rel (%p1070) target = $region76
        $region75: #{tpu_custom_call.1} parent=51 // pred_region
          %s1073 = smul.u32 2, %s29
          %1075 = vsyncadd %s1066, 0
          %s1076 = smul.addr %s1073, 8
          %s1077 = scalar_lea.hbm %s8, %s1076
          %s1078 = sshll.u32 %s1069, 4
          %s1079 = int_to_ptr.vmem [resolvable:$true] %s1078
          %s1080 = sshll.u32 %s1077, 4
          %s1081 = int_to_ptr.hbm [resolvable:$true] %s1080
          %1086 = dma.vmem_to_hbm [thread:$0]  %s1079, 256, %s1081, %s1066, 128, 128, 8
        $region76: #{tpu_custom_call.1} parent=51 // pred_fallthru
          _
      $region52: #{tpu_custom_call.1} parent=5 // pred_fallthru
        _
      %p1087 = scmp.le.s32.totalorder 2, %s24
      // Predicated region
      $region77: #{tpu_custom_call.1} parent=5 // pred_check
        %p1088 = pneg %p1087
      $region78: #{tpu_custom_call.1} parent=5 // pred_check_branch
        %1090 = sbr.rel (%p1088) target = $region80
      $region79: #{tpu_custom_call.1} parent=5 // pred_region
        %s1091 = ssub.s32 %s24, 2
        // Predicated region
        $region81: #{tpu_custom_call.1} parent=79 // pred_check
          %p1092 = pneg %p231
        $region82: #{tpu_custom_call.1} parent=79 // pred_check_branch
          %1094 = sbr.rel (%p1092) target = $region84
        $region83: #{tpu_custom_call.1} parent=79 // pred_region
          %s1095 = sand.u32 %s216, 1
          %s1096 = scalar_lea.sflag [#allocation4], %s1095
          %s1097 = sand.u32 %s216, 1
          %s1098 = smul.addr %s1097, 16
          %s1099 = scalar_lea.vmem [#allocation11], %s1098
          %1101 = dma.done %s1096, 256
        $region84: #{tpu_custom_call.1} parent=79 // pred_fallthru
          _
      $region80: #{tpu_custom_call.1} parent=5 // pred_fallthru
        _
    $region6: #{tpu_custom_call.1} parent=1 // loop_footer
      %s28 = sadd.s32 1, %s24
    $region7: #{tpu_custom_call.1} parent=1 // loop_footer_branch
      %23 = sbr.rel target = $region3
    $region8: #{tpu_custom_call.1} parent=1 // loop_exit
      _
    %1102 = vsyncpa [#allocation3], 1
    %s1103 = scalar_lea.sflag [#allocation3], 1
    %1104 = vsyncpa %s1103, 1
    %1105 = vsyncpa [#allocation6], 1
    %s1106 = scalar_lea.sflag [#allocation6], 1
    %1107 = vsyncpa %s1106, 1
    %1108 = vsyncpa [#allocation9], 1
    %1109 = vsyncpa [#allocation4], 1
    %s1110 = scalar_lea.sflag [#allocation4], 1
    %1111 = vsyncpa %s1110, 1

</llo_original>
